<compile_context>
chip_gen: v7x
topology: tpu7x:2x2x1
jax: 0.10.0
libtpu: 0.0.40
codegen_flags: <defaults>
</compile_context>

<pallas_src>
import functools

import jax
import jax.numpy as jnp
from jax.experimental import pallas as pl
from jax.experimental.pallas import tpu as pltpu

_SMOOTH = 1e-5


def _boundary_dou_partials_kernel(x_ref, t_ref, out_ref, *, img_h):
    """Per-block partial sums for the BoundaryDoU loss.

    x_ref:   (TH, W) logits block (native dtype), TH = BB * img_h
    t_ref:   (TH, W) target block (native dtype)
    out_ref: (1, 5, 8, W) f32 partial sums:
             [C (boundary count), S (nonzero target), sum(score*t),
              sum(t*t), sum(score*score)]
    """
    # ---- target-only phase (3x3 cross conv + boundary mask) ----------------
    t = t_ref[...].astype(jnp.float32)          # cast AFTER the DMA
    TH, W = t.shape

    rows = jax.lax.broadcasted_iota(jnp.int32, (TH, W), 0)
    zrow = jnp.zeros((1, W), jnp.float32)
    zcol = jnp.zeros((TH, 1), jnp.float32)

    # conv2d with kernel [[0,1,0],[1,1,1],[0,1,0]], zero padding:
    # center + 4 neighbor shifts.  Vertical shifts additionally mask the
    # first/last row of every image stacked in this block.
    up_raw = jnp.concatenate([zrow, t[:-1, :]], axis=0)      # t[i-1, j]
    down_raw = jnp.concatenate([t[1:, :], zrow], axis=0)     # t[i+1, j]
    up = jnp.where(rows % img_h == 0, 0.0, up_raw)
    down = jnp.where(rows % img_h == img_h - 1, 0.0, down_raw)
    left = jnp.concatenate([zcol, t[:, :-1]], axis=1)        # t[i, j-1]
    right = jnp.concatenate([t[:, 1:], zcol], axis=1)        # t[i, j+1]
    conv = t + up + down + left + right

    y_mul = conv * t                                          # Y = Y * target
    # Y[Y == 5] = 0 ; C = count_nonzero(Y)
    boundary = jnp.logical_and(y_mul != 0.0, y_mul != 5.0).astype(jnp.float32)
    tnz = (t != 0.0).astype(jnp.float32)                      # S terms
    tt = t * t                                                # y_sum terms

    # ---- score phase (EUP sigmoid overlaps the VPU-heavy phase above) ------
    score = jax.nn.sigmoid(x_ref[...].astype(jnp.float32))
    st = score * t                                            # intersect terms
    ss = score * score                                        # z_sum terms

    # ---- VPU-only partial reduction to an (8, W) vreg-shaped tile ----------
    if TH % 8 == 0:
        def psum(v):
            return v.reshape(TH // 8, 8, W).sum(axis=0)
    else:
        # Fallback for row counts not aligned to the sublane size: full sum
        # placed at [0, 0] of the partial tile (only taken when the block
        # covers the entire array, i.e. a single grid step).
        r8 = jax.lax.broadcasted_iota(jnp.int32, (8, W), 0)
        c8 = jax.lax.broadcasted_iota(jnp.int32, (8, W), 1)
        onehot = jnp.logical_and(r8 == 0, c8 == 0)

        def psum(v):
            return jnp.where(onehot, jnp.sum(v), 0.0)

    out_ref[0, 0, :, :] = psum(boundary)   # C
    out_ref[0, 1, :, :] = psum(tnz)        # S
    out_ref[0, 2, :, :] = psum(st)         # intersect
    out_ref[0, 3, :, :] = psum(tt)         # y_sum
    out_ref[0, 4, :, :] = psum(ss)         # z_sum


@jax.jit
def boundary_dou_loss(inputs, target):
    # Accept [B, 1, H, W] (PyTorch NCHW layout, C=1) or [B, H, W].
    if inputs.ndim == 4 and inputs.shape[1] == 1:
        inputs = inputs[:, 0]
    if target.ndim == 4 and target.shape[1] == 1:
        target = target[:, 0]
    assert inputs.shape == target.shape, (
        f"predict {inputs.shape} & target {target.shape} shape do not match")
    B, H, W = inputs.shape

    # Flatten the batch into rows; free reshape, keeps W as the lane dim.
    # Native dtypes go straight into the kernel (cast happens in VMEM).
    x2 = inputs.reshape(B * H, W)
    t2 = target.reshape(B * H, W)

    # Images per grid step: the largest divisor of B whose block (inputs are
    # double-buffered by the pipeline, plus ~6 live (TH, W) f32 temporaries)
    # stays inside a conservative VMEM budget.
    bytes_per_image = H * W * (
        2 * inputs.dtype.itemsize + 2 * target.dtype.itemsize + 6 * 4)
    budget = 8 * 1024 * 1024
    bb_cap = max(1, min(B, budget // max(1, bytes_per_image)))
    bb = 1
    for cand in range(bb_cap, 0, -1):
        if B % cand == 0:
            bb = cand
            break
    if H % 8 != 0:
        # Block rows must either be 8-aligned or span the whole array.
        bb = B
    th = bb * H
    grid_steps = B // bb

    partials = pl.pallas_call(
        functools.partial(_boundary_dou_partials_kernel, img_h=H),
        out_shape=jax.ShapeDtypeStruct((grid_steps, 5, 8, W), jnp.float32),
        grid_spec=pltpu.PrefetchScalarGridSpec(
            num_scalar_prefetch=0,
            grid=(grid_steps,),
            in_specs=[
                pl.BlockSpec((th, W), lambda g: (g, 0)),
                pl.BlockSpec((th, W), lambda g: (g, 0)),
            ],
            out_specs=pl.BlockSpec((1, 5, 8, W), lambda g: (g, 0, 0, 0)),
        ),
        compiler_params=pltpu.CompilerParams(
            dimension_semantics=("parallel",)),
    )(x2, t2)

    # Tiny final reduction + loss combine in plain JAX (negligible work; this
    # is what keeps the grid axis carry-free and hence "parallel").
    sums = jnp.sum(partials, axis=(0, 2, 3))            # (5,)
    C, S, intersect, y_sum, z_sum = sums[0], sums[1], sums[2], sums[3], sums[4]

    alpha = 1.0 - (C + _SMOOTH) / (S + _SMOOTH)
    alpha = 2.0 * alpha - 1.0
    alpha = jnp.minimum(alpha, 0.8)
    return ((z_sum + y_sum - 2.0 * intersect + _SMOOTH)
            / (z_sum + y_sum - (1.0 + alpha) * intersect + _SMOOTH))


def _reference_loss(inputs, target):
    # Pure-JAX reference mirroring the PyTorch module (verification only).
    if inputs.ndim == 4 and inputs.shape[1] == 1:
        inputs = inputs[:, 0]
    if target.ndim == 4 and target.shape[1] == 1:
        target = target[:, 0]
    score = jax.nn.sigmoid(inputs.astype(jnp.float32))
    target = target.astype(jnp.float32)
    kernel = jnp.array([[0., 1., 0.], [1., 1., 1.], [0., 1., 0.]], jnp.float32)
    conv = jax.lax.conv_general_dilated(
        target[:, None, :, :], kernel[None, None, :, :],
        window_strides=(1, 1), padding="SAME",
        dimension_numbers=("NCHW", "OIHW", "NCHW"))[:, 0]
    Y = conv * target
    Y = jnp.where(Y == 5.0, 0.0, Y)
    C = jnp.count_nonzero(Y).astype(jnp.float32)
    S = jnp.count_nonzero(target).astype(jnp.float32)
    smooth = 1e-5
    alpha = 1.0 - (C + smooth) / (S + smooth)
    alpha = 2.0 * alpha - 1.0
    alpha = jnp.minimum(alpha, 0.8)
    intersect = jnp.sum(score * target)
    y_sum = jnp.sum(target * target)
    z_sum = jnp.sum(score * score)
    return ((z_sum + y_sum - 2.0 * intersect + smooth)
            / (z_sum + y_sum - (1.0 + alpha) * intersect + smooth))


if __name__ == "__main__":
    key = jax.random.PRNGKey(0)
    k1, k2 = jax.random.split(key)
    B, C_, H, W = 2, 1, 16, 16
    # Native dtypes: bf16 logits, f32 {0,1} targets (kernel casts in VMEM).
    logits = jax.random.normal(k1, (B, C_, H, W), dtype=jnp.float32).astype(
        jnp.bfloat16)
    target = (jax.random.uniform(k2, (B, C_, H, W)) > 0.5).astype(jnp.float32)

    loss = jax.block_until_ready(boundary_dou_loss(logits, target))
    ref = jax.block_until_ready(_reference_loss(logits, target))
    assert jnp.allclose(loss, ref, rtol=1e-4, atol=1e-6), (loss, ref)
    print("KERNEL_OK")
</pallas_src>

<mosaic_0001>
module attributes {stable_mosaic.version = 11 : i64} {
  func.func @_boundary_dou_partials_kernel(%arg0: i32, %arg1: memref<32x16xbf16, #tpu.memory_space<vmem>>, %arg2: memref<32x16xf32, #tpu.memory_space<vmem>>, %arg3: memref<1x5x8x16xf32, #tpu.memory_space<vmem>>) attributes {dimension_semantics = [#tpu.dimension_semantics<parallel>], iteration_bounds = array<i64: 1>, scalar_prefetch = 0 : i64, scratch_operands = 0 : i64, tpu.core_type = #tpu.core_type<tc>, window_params = [{transform_indices = @transform_0, window_bounds = array<i64: 32, 16>}, {transform_indices = @transform_1, window_bounds = array<i64: 32, 16>}, {transform_indices = @transform_2, window_bounds = array<i64: 1, 5, 8, 16>}]} {
    %c0 = arith.constant 0 : index
    %c0_0 = arith.constant 0 : index
    %0 = vector.load %arg2[%c0, %c0_0] : memref<32x16xf32, #tpu.memory_space<vmem>>, vector<32x16xf32>
    %1 = tpu.iota {dimensions = array<i32: 0>} : vector<32x16xi32>
    %cst = arith.constant 0.000000e+00 : f32
    %2 = vector.broadcast %cst : f32 to vector<1x16xf32>
    %cst_1 = arith.constant 0.000000e+00 : f32
    %3 = vector.broadcast %cst_1 : f32 to vector<32x1xf32>
    %4 = vector.extract_strided_slice %0 {offsets = [0, 0], sizes = [31, 16], strides = [1, 1]} : vector<32x16xf32> to vector<31x16xf32>
    %5 = tpu.concatenate %2, %4 in 0 : vector<1x16xf32>, vector<31x16xf32> -> vector<32x16xf32>
    %6 = vector.extract_strided_slice %0 {offsets = [1, 0], sizes = [31, 16], strides = [1, 1]} : vector<32x16xf32> to vector<31x16xf32>
    %7 = tpu.concatenate %6, %2 in 0 : vector<31x16xf32>, vector<1x16xf32> -> vector<32x16xf32>
    %c16_i32 = arith.constant 16 : i32
    %c0_i32 = arith.constant 0 : i32
    %8 = arith.cmpi eq, %c16_i32, %c0_i32 : i32
    %c1_i32 = arith.constant 1 : i32
    %9 = arith.select %8, %c1_i32, %c16_i32 : i32
    %10 = vector.broadcast %9 : i32 to vector<32x16xi32>
    %11 = arith.remsi %1, %10 : vector<32x16xi32>
    %c0_i32_2 = arith.constant 0 : i32
    %12 = vector.broadcast %c0_i32_2 : i32 to vector<32x16xi32>
    %13 = arith.cmpi ne, %11, %12 : vector<32x16xi32>
    %c0_i32_3 = arith.constant 0 : i32
    %14 = vector.broadcast %c0_i32_3 : i32 to vector<32x16xi32>
    %15 = arith.cmpi slt, %11, %14 : vector<32x16xi32>
    %c0_i32_4 = arith.constant 0 : i32
    %16 = arith.cmpi slt, %9, %c0_i32_4 : i32
    %17 = vector.broadcast %16 : i1 to vector<32x16xi1>
    %18 = vector.broadcast %17 : vector<32x16xi1> to vector<32x16xi1>
    %19 = arith.xori %15, %18 : vector<32x16xi1>
    %20 = arith.andi %19, %13 : vector<32x16xi1>
    %21 = vector.broadcast %9 : i32 to vector<32x16xi32>
    %22 = arith.addi %11, %21 : vector<32x16xi32>
    %23 = arith.select %20, %22, %11 : vector<32x16xi1>, vector<32x16xi32>
    %c0_i32_5 = arith.constant 0 : i32
    %24 = vector.broadcast %c0_i32_5 : i32 to vector<32x16xi32>
    %25 = arith.cmpi eq, %23, %24 : vector<32x16xi32>
    %cst_6 = arith.constant 0.000000e+00 : f32
    %26 = vector.broadcast %cst_6 : f32 to vector<32x16xf32>
    %27 = arith.select %25, %26, %5 : vector<32x16xi1>, vector<32x16xf32>
    %c16_i32_7 = arith.constant 16 : i32
    %c0_i32_8 = arith.constant 0 : i32
    %28 = arith.cmpi eq, %c16_i32_7, %c0_i32_8 : i32
    %c1_i32_9 = arith.constant 1 : i32
    %29 = arith.select %28, %c1_i32_9, %c16_i32_7 : i32
    %30 = vector.broadcast %29 : i32 to vector<32x16xi32>
    %31 = arith.remsi %1, %30 : vector<32x16xi32>
    %c0_i32_10 = arith.constant 0 : i32
    %32 = vector.broadcast %c0_i32_10 : i32 to vector<32x16xi32>
    %33 = arith.cmpi ne, %31, %32 : vector<32x16xi32>
    %c0_i32_11 = arith.constant 0 : i32
    %34 = vector.broadcast %c0_i32_11 : i32 to vector<32x16xi32>
    %35 = arith.cmpi slt, %31, %34 : vector<32x16xi32>
    %c0_i32_12 = arith.constant 0 : i32
    %36 = arith.cmpi slt, %29, %c0_i32_12 : i32
    %37 = vector.broadcast %36 : i1 to vector<32x16xi1>
    %38 = vector.broadcast %37 : vector<32x16xi1> to vector<32x16xi1>
    %39 = arith.xori %35, %38 : vector<32x16xi1>
    %40 = arith.andi %39, %33 : vector<32x16xi1>
    %41 = vector.broadcast %29 : i32 to vector<32x16xi32>
    %42 = arith.addi %31, %41 : vector<32x16xi32>
    %43 = arith.select %40, %42, %31 : vector<32x16xi1>, vector<32x16xi32>
    %c15_i32 = arith.constant 15 : i32
    %44 = vector.broadcast %c15_i32 : i32 to vector<32x16xi32>
    %45 = arith.cmpi eq, %43, %44 : vector<32x16xi32>
    %cst_13 = arith.constant 0.000000e+00 : f32
    %46 = vector.broadcast %cst_13 : f32 to vector<32x16xf32>
    %47 = arith.select %45, %46, %7 : vector<32x16xi1>, vector<32x16xf32>
    %48 = vector.extract_strided_slice %0 {offsets = [0, 0], sizes = [32, 15], strides = [1, 1]} : vector<32x16xf32> to vector<32x15xf32>
    %49 = tpu.concatenate %3, %48 in 1 : vector<32x1xf32>, vector<32x15xf32> -> vector<32x16xf32>
    %50 = vector.extract_strided_slice %0 {offsets = [0, 1], sizes = [32, 15], strides = [1, 1]} : vector<32x16xf32> to vector<32x15xf32>
    %51 = tpu.concatenate %50, %3 in 1 : vector<32x15xf32>, vector<32x1xf32> -> vector<32x16xf32>
    %52 = arith.addf %0, %27 : vector<32x16xf32>
    %53 = arith.addf %52, %47 : vector<32x16xf32>
    %54 = arith.addf %53, %49 : vector<32x16xf32>
    %55 = arith.addf %54, %51 : vector<32x16xf32>
    %56 = arith.mulf %55, %0 : vector<32x16xf32>
    %cst_14 = arith.constant 0.000000e+00 : f32
    %57 = vector.broadcast %cst_14 : f32 to vector<32x16xf32>
    %58 = arith.cmpf one, %56, %57 : vector<32x16xf32>
    %cst_15 = arith.constant 5.000000e+00 : f32
    %59 = vector.broadcast %cst_15 : f32 to vector<32x16xf32>
    %60 = arith.cmpf one, %56, %59 : vector<32x16xf32>
    %61 = arith.andi %58, %60 : vector<32x16xi1>
    %62 = arith.extui %61 : vector<32x16xi1> to vector<32x16xi32>
    %63 = arith.sitofp %62 : vector<32x16xi32> to vector<32x16xf32>
    %cst_16 = arith.constant 0.000000e+00 : f32
    %64 = vector.broadcast %cst_16 : f32 to vector<32x16xf32>
    %65 = arith.cmpf one, %0, %64 : vector<32x16xf32>
    %66 = arith.extui %65 : vector<32x16xi1> to vector<32x16xi32>
    %67 = arith.sitofp %66 : vector<32x16xi32> to vector<32x16xf32>
    %68 = arith.mulf %0, %0 : vector<32x16xf32>
    %c0_17 = arith.constant 0 : index
    %c0_18 = arith.constant 0 : index
    %69 = vector.load %arg1[%c0_17, %c0_18] : memref<32x16xbf16, #tpu.memory_space<vmem>>, vector<32x16xbf16>
    %70 = arith.extf %69 : vector<32x16xbf16> to vector<32x16xf32>
    %71 = arith.negf %70 : vector<32x16xf32>
    %72 = math.exp %71 : vector<32x16xf32>
    %cst_19 = arith.constant 1.000000e+00 : f32
    %73 = vector.broadcast %cst_19 : f32 to vector<32x16xf32>
    %74 = arith.addf %73, %72 : vector<32x16xf32>
    %75 = arith.divf %73, %74 : vector<32x16xf32>
    %76 = arith.mulf %75, %0 : vector<32x16xf32>
    %77 = arith.mulf %75, %75 : vector<32x16xf32>
    %78 = vector.shape_cast %63 : vector<32x16xf32> to vector<4x8x16xf32>
    %cst_20 = arith.constant dense<0.000000e+00> : vector<8x16xf32>
    %79 = vector.multi_reduction <add>, %78, %cst_20 [0] : vector<4x8x16xf32> to vector<8x16xf32>
    %c0_21 = arith.constant 0 : index
    %c0_22 = arith.constant 0 : index
    %c0_23 = arith.constant 0 : index
    %c0_24 = arith.constant 0 : index
    %80 = vector.load %arg3[%c0_21, %c0_22, %c0_23, %c0_24] : memref<1x5x8x16xf32, #tpu.memory_space<vmem>>, vector<1x1x8x16xf32>
    %81 = vector.shape_cast %80 : vector<1x1x8x16xf32> to vector<8x16xf32>
    %82 = vector.shape_cast %79 : vector<8x16xf32> to vector<1x1x8x16xf32>
    tpu.vector_store %arg3[%c0_21, %c0_22, %c0_23, %c0_24], %82 {strides = array<i32>} : memref<1x5x8x16xf32, #tpu.memory_space<vmem>>, vector<1x1x8x16xf32>,
    %83 = vector.shape_cast %67 : vector<32x16xf32> to vector<4x8x16xf32>
    %cst_25 = arith.constant dense<0.000000e+00> : vector<8x16xf32>
    %84 = vector.multi_reduction <add>, %83, %cst_25 [0] : vector<4x8x16xf32> to vector<8x16xf32>
    %c0_26 = arith.constant 0 : index
    %c1 = arith.constant 1 : index
    %c0_27 = arith.constant 0 : index
    %c0_28 = arith.constant 0 : index
    %85 = vector.load %arg3[%c0_26, %c1, %c0_27, %c0_28] : memref<1x5x8x16xf32, #tpu.memory_space<vmem>>, vector<1x1x8x16xf32>
    %86 = vector.shape_cast %85 : vector<1x1x8x16xf32> to vector<8x16xf32>
    %87 = vector.shape_cast %84 : vector<8x16xf32> to vector<1x1x8x16xf32>
    tpu.vector_store %arg3[%c0_26, %c1, %c0_27, %c0_28], %87 {strides = array<i32>} : memref<1x5x8x16xf32, #tpu.memory_space<vmem>>, vector<1x1x8x16xf32>,
    %88 = vector.shape_cast %76 : vector<32x16xf32> to vector<4x8x16xf32>
    %cst_29 = arith.constant dense<0.000000e+00> : vector<8x16xf32>
    %89 = vector.multi_reduction <add>, %88, %cst_29 [0] : vector<4x8x16xf32> to vector<8x16xf32>
    %c0_30 = arith.constant 0 : index
    %c2 = arith.constant 2 : index
    %c0_31 = arith.constant 0 : index
    %c0_32 = arith.constant 0 : index
    %90 = vector.load %arg3[%c0_30, %c2, %c0_31, %c0_32] : memref<1x5x8x16xf32, #tpu.memory_space<vmem>>, vector<1x1x8x16xf32>
    %91 = vector.shape_cast %90 : vector<1x1x8x16xf32> to vector<8x16xf32>
    %92 = vector.shape_cast %89 : vector<8x16xf32> to vector<1x1x8x16xf32>
    tpu.vector_store %arg3[%c0_30, %c2, %c0_31, %c0_32], %92 {strides = array<i32>} : memref<1x5x8x16xf32, #tpu.memory_space<vmem>>, vector<1x1x8x16xf32>,
    %93 = vector.shape_cast %68 : vector<32x16xf32> to vector<4x8x16xf32>
    %cst_33 = arith.constant dense<0.000000e+00> : vector<8x16xf32>
    %94 = vector.multi_reduction <add>, %93, %cst_33 [0] : vector<4x8x16xf32> to vector<8x16xf32>
    %c0_34 = arith.constant 0 : index
    %c3 = arith.constant 3 : index
    %c0_35 = arith.constant 0 : index
    %c0_36 = arith.constant 0 : index
    %95 = vector.load %arg3[%c0_34, %c3, %c0_35, %c0_36] : memref<1x5x8x16xf32, #tpu.memory_space<vmem>>, vector<1x1x8x16xf32>
    %96 = vector.shape_cast %95 : vector<1x1x8x16xf32> to vector<8x16xf32>
    %97 = vector.shape_cast %94 : vector<8x16xf32> to vector<1x1x8x16xf32>
    tpu.vector_store %arg3[%c0_34, %c3, %c0_35, %c0_36], %97 {strides = array<i32>} : memref<1x5x8x16xf32, #tpu.memory_space<vmem>>, vector<1x1x8x16xf32>,
    %98 = vector.shape_cast %77 : vector<32x16xf32> to vector<4x8x16xf32>
    %cst_37 = arith.constant dense<0.000000e+00> : vector<8x16xf32>
    %99 = vector.multi_reduction <add>, %98, %cst_37 [0] : vector<4x8x16xf32> to vector<8x16xf32>
    %c0_38 = arith.constant 0 : index
    %c4 = arith.constant 4 : index
    %c0_39 = arith.constant 0 : index
    %c0_40 = arith.constant 0 : index
    %100 = vector.load %arg3[%c0_38, %c4, %c0_39, %c0_40] : memref<1x5x8x16xf32, #tpu.memory_space<vmem>>, vector<1x1x8x16xf32>
    %101 = vector.shape_cast %100 : vector<1x1x8x16xf32> to vector<8x16xf32>
    %102 = vector.shape_cast %99 : vector<8x16xf32> to vector<1x1x8x16xf32>
    tpu.vector_store %arg3[%c0_38, %c4, %c0_39, %c0_40], %102 {strides = array<i32>} : memref<1x5x8x16xf32, #tpu.memory_space<vmem>>, vector<1x1x8x16xf32>,
    return
  }
  func.func @transform_0(%arg0: i32) -> (i32, i32) {
    %c0_i32 = arith.constant 0 : i32
    %c0_i32_0 = arith.constant 0 : i32
    return %arg0, %c0_i32 : i32, i32
  }
  func.func @transform_1(%arg0: i32) -> (i32, i32) {
    %c0_i32 = arith.constant 0 : i32
    %c0_i32_0 = arith.constant 0 : i32
    return %arg0, %c0_i32 : i32, i32
  }
  func.func @transform_2(%arg0: i32) -> (i32, i32, i32, i32) {
    %c0_i32 = arith.constant 0 : i32
    %c0_i32_0 = arith.constant 0 : i32
    %c0_i32_1 = arith.constant 0 : i32
    %c0_i32_2 = arith.constant 0 : i32
    return %arg0, %c0_i32, %c0_i32_0, %c0_i32_1 : i32, i32, i32, i32
  }
}

</mosaic_0001>

<llo_original>
// kernel: boundary_dou_loss.1
$region0: #{boundary_dou_loss.1}
  #allocation0 [shape = 'u32[]', space=smem, size = 0x4, offset = 0x4, fixed_abs, tag = 'smem constant byte address 0x4 - core index']
  #allocation1 [shape = 'u32[144,128]{1,0:T(1,128)}', space=vmem, size = 0x12000, scoped, tag = 'internal scratch']
  %s0 = inlined_call_operand.hbm [shape: bf16[32,16], index: 0, kind: input, shape index: {}]
  %s1 = inlined_call_operand.hbm [shape: f32[32,16], index: 1, kind: input, shape index: {}]
  %s2 = inlined_call_operand.vmem [shape: f32[1,5,8,16], index: 2, kind: output, shape index: {}]
  %s3 = sld [smem:[#allocation0]]
  $region26: #{boundary_dou_loss.1} parent=0
    _
  %s5 = ssub.s32 1, %s3
  %s6 = scalar_select 0, %s5, %s3
  $region1: #{boundary_dou_loss.1} parent=0
    #allocation2 [shape = 'u8[8192]{0}', space=vmem, size = 0x2000, scoped, tag = 'input window, operand 0, single buffered']
    #allocation3 [shape = 's32[1]{0}', space=sflag, size = 0x4, scoped, tag = 'scoped memory for boundary_dou_loss.1']
    #allocation4 [shape = 'u8[16384]{0}', space=vmem, size = 0x4000, scoped, tag = 'input window, operand 1, single buffered']
    #allocation5 [shape = 's32[1]{0}', space=sflag, size = 0x4, scoped, tag = 'scoped memory for boundary_dou_loss.1']
    %7 = vsyncpa [#allocation3], 0
    %8 = vsyncpa [#allocation5], 0
    // Predicated region
    $region2: #{boundary_dou_loss.1} parent=1 // pred_check
      _
    $region3: #{boundary_dou_loss.1} parent=1 // pred_check_branch
      %10 = sbr.rel (0) target = $region5
    $region4: #{boundary_dou_loss.1} parent=1 // pred_region
      %s12 = ssub.s32 256, 256
      %13 = vsyncadd [#allocation3], %s12
      %s14 = sshll.u32 [#allocation2], 4
      %s15 = int_to_ptr.vmem [resolvable:$true] %s14
      %20 = dma.hbm_to_vmem [thread:$0]  %s0, 256, %s15, [#allocation3], 64, 64, 4
    $region5: #{boundary_dou_loss.1} parent=1 // pred_fallthru
      _
    // Predicated region
    $region6: #{boundary_dou_loss.1} parent=1 // pred_check
      _
    $region7: #{boundary_dou_loss.1} parent=1 // pred_check_branch
      %22 = sbr.rel (0) target = $region9
    $region8: #{boundary_dou_loss.1} parent=1 // pred_region
      %s24 = ssub.s32 512, 512
      %25 = vsyncadd [#allocation5], %s24
      %s26 = sshll.u32 [#allocation4], 4
      %s27 = int_to_ptr.vmem [resolvable:$true] %s26
      %32 = dma.hbm_to_vmem [thread:$0]  %s1, 512, %s27, [#allocation5], 128, 128, 8
    $region9: #{boundary_dou_loss.1} parent=1 // pred_fallthru
      _
    // Predicated region
    $region10: #{boundary_dou_loss.1} parent=1 // pred_check
      _
    $region11: #{boundary_dou_loss.1} parent=1 // pred_check_branch
      %34 = sbr.rel (0) target = $region13
    $region12: #{boundary_dou_loss.1} parent=1 // pred_region
      %35 = dma.done [#allocation3], 256
    $region13: #{boundary_dou_loss.1} parent=1 // pred_fallthru
      _
    // Predicated region
    $region14: #{boundary_dou_loss.1} parent=1 // pred_check
      _
    $region15: #{boundary_dou_loss.1} parent=1 // pred_check_branch
      %37 = sbr.rel (0) target = $region17
    $region16: #{boundary_dou_loss.1} parent=1 // pred_region
      %38 = dma.done [#allocation5], 512
    $region17: #{boundary_dou_loss.1} parent=1 // pred_fallthru
      _
    %v39 = vld [vmem:[#allocation4] sm:$0xff]
    %v40 = vld [vmem:[#allocation4 + $0x8] sm:$0xff]
    %v41 = vld [vmem:[#allocation4 + $0x10] sm:$0xff]
    %v42 = vld [vmem:[#allocation4 + $0x18] sm:$0xff]
    %v43 = vlaneseq
    %v44 = vshrl.u32 %v43, 7
    %v45 = vadd.s32 %v44, 8
    %v46 = vadd.s32 %v44, 16
    %v47 = vadd.s32 %v44, 24
    %vm52 = vcmask 1040384
    %v53 = vrot.slane %v39, 7
    %v54 = vrot.slane %v40, 7
    %v55 = vsel %vm52, %v53, %v54
    %v56 = vrot.slane %v41, 7
    %v57 = vsel %vm52, %v54, %v56
    %v58 = vrot.slane %v42, 7
    %v59 = vsel %vm52, %v56, %v58
    %v64 = vsel %vm52, 0.0, %v53
    %vm65 = vcmask 1046528
    %v66 = vrot.slane %v39, 1
    %v67 = vrot.slane %v40, 1
    %v68 = vsel %vm65, %v66, %v67
    %v69 = vrot.slane %v41, 1
    %v70 = vsel %vm65, %v67, %v69
    %v71 = vrot.slane %v42, 1
    %v72 = vsel %vm65, %v69, %v71
    %v77 = vsel %vm65, %v71, 0.0
    %vm78 = vcmp.lt.s32.totalorder %v44, 0
    %v79 = vsub.s32 0, %v44
    %v80 = vsel %vm78, %v79, %v44
    %v81 = vshrl.u32 %v80, 4
    %v82 = vand.u32 %v80, 15
    %v83 = vsub.s32 0, %v82
    %v84 = vsel %vm78, %v83, %v82
    %vm85 = vcmp.lt.s32.totalorder %v45, 0
    %v86 = vsub.s32 0, %v45
    %v87 = vsel %vm85, %v86, %v45
    %v88 = vshrl.u32 %v87, 4
    %v89 = vand.u32 %v87, 15
    %v90 = vsub.s32 0, %v89
    %v91 = vsel %vm85, %v90, %v89
    %vm92 = vcmp.lt.s32.totalorder %v46, 0
    %v93 = vsub.s32 0, %v46
    %v94 = vsel %vm92, %v93, %v46
    %v95 = vshrl.u32 %v94, 4
    %v96 = vand.u32 %v94, 15
    %v97 = vsub.s32 0, %v96
    %v98 = vsel %vm92, %v97, %v96
    %vm99 = vcmp.lt.s32.totalorder %v47, 0
    %v100 = vsub.s32 0, %v47
    %v101 = vsel %vm99, %v100, %v47
    %v102 = vshrl.u32 %v101, 4
    %v103 = vand.u32 %v101, 15
    %v104 = vsub.s32 0, %v103
    %v105 = vsel %vm99, %v104, %v103
    %vm106 = vcmp.ne.s32.totalorder %v84, 0
    %vm107 = vcmp.ne.s32.totalorder %v91, 0
    %vm108 = vcmp.ne.s32.totalorder %v98, 0
    %vm109 = vcmp.ne.s32.totalorder %v105, 0
    %vm110 = vcmp.lt.s32.totalorder %v84, 0
    %vm111 = vcmp.lt.s32.totalorder %v91, 0
    %vm112 = vcmp.lt.s32.totalorder %v98, 0
    %vm113 = vcmp.lt.s32.totalorder %v105, 0
    %vm114 = vmand %vm110, %vm106
    %vm115 = vmand %vm111, %vm107
    %vm116 = vmand %vm112, %vm108
    %vm117 = vmand %vm113, %vm109
    %v118 = vadd.s32 %v84, 16
    %v119 = vadd.s32 %v91, 16
    %v120 = vadd.s32 %v98, 16
    %v121 = vadd.s32 %v105, 16
    %v122 = vsel %vm114, %v118, %v84
    %v123 = vsel %vm115, %v119, %v91
    %v124 = vsel %vm116, %v120, %v98
    %v125 = vsel %vm117, %v121, %v105
    %vm126 = vcmp.eq.s32.totalorder %v122, 0
    %vm127 = vcmp.eq.s32.totalorder %v123, 0
    %vm128 = vcmp.eq.s32.totalorder %v124, 0
    %vm129 = vcmp.eq.s32.totalorder %v125, 0
    %v130 = vsel %vm126, 0.0, %v64
    %v131 = vsel %vm127, 0.0, %v55
    %v132 = vsel %vm128, 0.0, %v57
    %v133 = vsel %vm129, 0.0, %v59
    %vm134 = vcmp.eq.s32.totalorder %v122, 15
    %vm135 = vcmp.eq.s32.totalorder %v123, 15
    %vm136 = vcmp.eq.s32.totalorder %v124, 15
    %vm137 = vcmp.eq.s32.totalorder %v125, 15
    %v138 = vsel %vm134, 0.0, %v68
    %v139 = vsel %vm135, 0.0, %v70
    %v140 = vsel %vm136, 0.0, %v72
    %v141 = vsel %vm137, 0.0, %v77
    %142 = vrot.lane.b32.xlu0 %v39, 1
    %v143 = vpop.permute.xlu0 %142
    %144 = vrot.lane.b32.xlu0 %v40, 1
    %v145 = vpop.permute.xlu0 %144
    %146 = vrot.lane.b32.xlu0 %v41, 1
    %v147 = vpop.permute.xlu0 %146
    %148 = vrot.lane.b32.xlu0 %v42, 1
    %v149 = vpop.permute.xlu0 %148
    %vm154 = vcmask 7168
    %v155 = vsel %vm154, 0.0, %v143
    %v156 = vsel %vm154, 0.0, %v145
    %v157 = vsel %vm154, 0.0, %v147
    %v158 = vsel %vm154, 0.0, %v149
    %159 = vrot.lane.b32.xlu0 %v39, 127
    %v160 = vpop.permute.xlu0 %159
    %161 = vrot.lane.b32.xlu0 %v40, 127
    %v162 = vpop.permute.xlu0 %161
    %163 = vrot.lane.b32.xlu0 %v41, 127
    %v164 = vpop.permute.xlu0 %163
    %165 = vrot.lane.b32.xlu0 %v42, 127
    %v166 = vpop.permute.xlu0 %165
    %vm171 = vcmask 121856
    %v172 = vsel %vm171, %v160, 0.0
    %v173 = vsel %vm171, %v162, 0.0
    %v174 = vsel %vm171, %v164, 0.0
    %v175 = vsel %vm171, %v166, 0.0
    %v176 = vadd.f32 %v39, %v130
    %v177 = vadd.f32 %v40, %v131
    %v178 = vadd.f32 %v41, %v132
    %v179 = vadd.f32 %v42, %v133
    %v180 = vadd.f32 %v176, %v138
    %v181 = vadd.f32 %v177, %v139
    %v182 = vadd.f32 %v178, %v140
    %v183 = vadd.f32 %v179, %v141
    %v184 = vadd.f32 %v180, %v155
    %v185 = vadd.f32 %v181, %v156
    %v186 = vadd.f32 %v182, %v157
    %v187 = vadd.f32 %v183, %v158
    %v188 = vadd.f32 %v184, %v172
    %v189 = vadd.f32 %v185, %v173
    %v190 = vadd.f32 %v186, %v174
    %v191 = vadd.f32 %v187, %v175
    %v192 = vmul.f32 %v188, %v39
    %v193 = vmul.f32 %v189, %v40
    %v194 = vmul.f32 %v190, %v41
    %v195 = vmul.f32 %v191, %v42
    %vm196 = vcmp.ne.f32.partialorder %v192, 0.0
    %vm197 = vcmp.ne.f32.partialorder %v193, 0.0
    %vm198 = vcmp.ne.f32.partialorder %v194, 0.0
    %vm199 = vcmp.ne.f32.partialorder %v195, 0.0
    %vm200 = vcmp.ne.f32.partialorder %v192, 5.0
    %vm201 = vcmp.ne.f32.partialorder %v193, 5.0
    %vm202 = vcmp.ne.f32.partialorder %v194, 5.0
    %vm203 = vcmp.ne.f32.partialorder %v195, 5.0
    %vm204 = vmand %vm196, %vm200
    %vm205 = vmand %vm197, %vm201
    %vm206 = vmand %vm198, %vm202
    %vm207 = vmand %vm199, %vm203
    %v208 = vsel %vm204, 1, 0
    %v209 = vsel %vm205, 1, 0
    %v210 = vsel %vm206, 1, 0
    %v211 = vsel %vm207, 1, 0
    %v212 = vcvt.s32.f32 %v208
    %v213 = vcvt.s32.f32 %v209
    %v214 = vcvt.s32.f32 %v210
    %v215 = vcvt.s32.f32 %v211
    %vm216 = vcmp.ne.f32.partialorder %v39, 0.0
    %vm217 = vcmp.ne.f32.partialorder %v40, 0.0
    %vm218 = vcmp.ne.f32.partialorder %v41, 0.0
    %vm219 = vcmp.ne.f32.partialorder %v42, 0.0
    %v220 = vsel %vm216, 1, 0
    %v221 = vsel %vm217, 1, 0
    %v222 = vsel %vm218, 1, 0
    %v223 = vsel %vm219, 1, 0
    %v224 = vcvt.s32.f32 %v220
    %v225 = vcvt.s32.f32 %v221
    %v226 = vcvt.s32.f32 %v222
    %v227 = vcvt.s32.f32 %v223
    %v228 = vmul.f32 %v39, %v39
    %v229 = vmul.f32 %v40, %v40
    %v230 = vmul.f32 %v41, %v41
    %v231 = vmul.f32 %v42, %v42
    %v232 = vld [vmem:[#allocation2] sm:$0xf]
    %v233 = vld [vmem:[#allocation2 + $0x4] sm:$0xf]
    %v234 = vld [vmem:[#allocation2 + $0x8] sm:$0xf]
    %v235 = vld [vmem:[#allocation2 + $0xc] sm:$0xf]
    %v236 = vunpack.c.l.bf16 %v232
    %v237 = vunpack.c.l.bf16 %v233
    %v238 = vunpack.c.l.bf16 %v234
    %v239 = vunpack.c.l.bf16 %v235
    %v240 = vxor.u32 %v236, 2147483648
    %v241 = vxor.u32 %v237, 2147483648
    %v242 = vxor.u32 %v238, 2147483648
    %v243 = vxor.u32 %v239, 2147483648
    %v244 = vmul.f32 %v240, 1.442695
    %v245 = vpow.pop %v244
    %v246 = vmul.f32 %v241, 1.442695
    %v247 = vpow.pop %v246
    %v248 = vmul.f32 %v242, 1.442695
    %v249 = vpow.pop %v248
    %v250 = vmul.f32 %v243, 1.442695
    %v251 = vpow.pop %v250
    %v252 = vadd.f32 %v245, 1.0
    %v253 = vadd.f32 %v247, 1.0
    %v254 = vadd.f32 %v249, 1.0
    %v255 = vadd.f32 %v251, 1.0
    %v256 = vrcp.pop %v252
    %v257 = vmul.f32 1.0, %v256
    %v258 = vrcp.pop %v253
    %v259 = vmul.f32 1.0, %v258
    %v260 = vrcp.pop %v254
    %v261 = vmul.f32 1.0, %v260
    %v262 = vrcp.pop %v255
    %v263 = vmul.f32 1.0, %v262
    %v264 = vmul.f32 %v257, %v39
    %v265 = vmul.f32 %v259, %v40
    %v266 = vmul.f32 %v261, %v41
    %v267 = vmul.f32 %v263, %v42
    %v268 = vmul.f32 %v257, %v257
    %v269 = vmul.f32 %v259, %v259
    %v270 = vmul.f32 %v261, %v261
    %v271 = vmul.f32 %v263, %v263
    %vm272 = vcmask 130048
    %v273 = vsel %vm272, %v212, 0.0
    %v274 = vsel %vm272, %v213, 0.0
    %v275 = vadd.f32 %v273, %v274
    %v276 = vsel %vm272, %v214, 0.0
    %v277 = vadd.f32 %v275, %v276
    %v278 = vsel %vm272, %v215, 0.0
    %v279 = vadd.f32 %v277, %v278
    %280 = vst.msk [vmem:[%s2] sm:$0xff] %vm272, %v279
    %v281 = vsel %vm272, %v224, 0.0
    %v282 = vsel %vm272, %v225, 0.0
    %v283 = vadd.f32 %v281, %v282
    %v284 = vsel %vm272, %v226, 0.0
    %v285 = vadd.f32 %v283, %v284
    %v286 = vsel %vm272, %v227, 0.0
    %v287 = vadd.f32 %v285, %v286
    %s288 = scalar_lea.vmem %s2, 8
    %289 = vst.msk [vmem:[%s288] sm:$0xff] %vm272, %v287
    %v290 = vsel %vm272, %v264, 0.0
    %v291 = vsel %vm272, %v265, 0.0
    %v292 = vadd.f32 %v290, %v291
    %v293 = vsel %vm272, %v266, 0.0
    %v294 = vadd.f32 %v292, %v293
    %v295 = vsel %vm272, %v267, 0.0
    %v296 = vadd.f32 %v294, %v295
    %s297 = scalar_lea.vmem %s2, 16
    %298 = vst.msk [vmem:[%s297] sm:$0xff] %vm272, %v296
    %v299 = vsel %vm272, %v228, 0.0
    %v300 = vsel %vm272, %v229, 0.0
    %v301 = vadd.f32 %v299, %v300
    %v302 = vsel %vm272, %v230, 0.0
    %v303 = vadd.f32 %v301, %v302
    %v304 = vsel %vm272, %v231, 0.0
    %v305 = vadd.f32 %v303, %v304
    %s306 = scalar_lea.vmem %s2, 24
    %307 = vst.msk [vmem:[%s306] sm:$0xff] %vm272, %v305
    %v308 = vsel %vm272, %v268, 0.0
    %v309 = vsel %vm272, %v269, 0.0
    %v310 = vadd.f32 %v308, %v309
    %v311 = vsel %vm272, %v270, 0.0
    %v312 = vadd.f32 %v310, %v311
    %v313 = vsel %vm272, %v271, 0.0
    %v314 = vadd.f32 %v312, %v313
    %s315 = scalar_lea.vmem %s2, 32
    %316 = vst.msk [vmem:[%s315] sm:$0xff] %vm272, %v314
    // Predicated region
    $region18: #{boundary_dou_loss.1} parent=1 // pred_check
      _
    $region19: #{boundary_dou_loss.1} parent=1 // pred_check_branch
      %318 = sbr.rel (0) target = $region21
    $region20: #{boundary_dou_loss.1} parent=1 // pred_region
      _
    $region21: #{boundary_dou_loss.1} parent=1 // pred_fallthru
      _
    // Predicated region
    $region22: #{boundary_dou_loss.1} parent=1 // pred_check
      _
    $region23: #{boundary_dou_loss.1} parent=1 // pred_check_branch
      %320 = sbr.rel (0) target = $region25
    $region24: #{boundary_dou_loss.1} parent=1 // pred_region
      _
    $region25: #{boundary_dou_loss.1} parent=1 // pred_fallthru
      _
    %321 = vsyncpa [#allocation3], 1
    %322 = vsyncpa [#allocation5], 1

</llo_original>
